<compile_context>
chip_gen: v7x
topology: tpu7x:2x2x1
jax: 0.10.0
libtpu: 0.0.40
codegen_flags: <defaults>
</compile_context>

<pallas_src>
import jax
import jax.numpy as jnp
from jax.experimental import pallas as pl
from jax.experimental.pallas import tpu as pltpu


def _mlp_kernel(xT_ref, w1T_ref, b1_ref, w2T_ref, b2_ref, outT_ref):
    """Two-layer ReLU MLP on a batch-on-lanes tile.

    xT_ref  : (in_dim, TB) f32   activation tile, lane axis = batch
    w1T_ref : (h1, in_dim) f32   VMEM-resident
    b1_ref  : (h1, 1)      f32   VMEM-resident
    w2T_ref : (h2, h1)     f32   VMEM-resident
    b2_ref  : (h2, 1)      f32   VMEM-resident
    outT_ref: (h2, TB)     out_dtype (lane-dense store)
    """
    # Layer 1: relu(W1^T @ x^T + b1); MXU with f32 accumulation.
    h = jnp.dot(w1T_ref[...], xT_ref[...], preferred_element_type=jnp.float32)
    h = jnp.maximum(h + b1_ref[...], 0.0)

    # Layer 2: relu(W2^T @ h^T + b2).
    o = jnp.dot(w2T_ref[...], h, preferred_element_type=jnp.float32)
    o = jnp.maximum(o + b2_ref[...], 0.0)

    outT_ref[...] = o.astype(outT_ref.dtype)


def state_action_mlp(obs, act, params, *, block_cols=2048,
                     out_dtype=jnp.bfloat16):
    """Batch-on-lanes pallas_call wrapper.

    obs: (B, obs_dim) f32, act: (B, act_dim) f32.
    params: (w1, b1, w2, b2) with weights stored (in_features, out_features)
    (i.e. transposed w.r.t. torch.nn.Linear), matching the previous version.
    Returns (B, units[-1]) in `out_dtype`.
    """
    w1, b1, w2, b2 = params
    batch = obs.shape[0]

    # Concat once outside the kernel; keep everything f32 for accuracy
    # (input bandwidth is negligible next to the output stream).
    x = jnp.concatenate([obs, act], axis=-1).astype(jnp.float32)   # (B, in1)
    in1 = x.shape[1]
    h1 = w1.shape[1]
    h2 = w2.shape[1]

    # Kernel-side ("transposed") parameter layout.
    w1T = jnp.transpose(w1).astype(jnp.float32)        # (h1, in1)
    w2T = jnp.transpose(w2).astype(jnp.float32)        # (h2, h1)
    b1c = jnp.reshape(b1, (h1, 1)).astype(jnp.float32)
    b2c = jnp.reshape(b2, (h2, 1)).astype(jnp.float32)

    # Lane-aligned batch and a tile that yields >= 2 grid steps whenever the
    # batch allows it (DMA/compute overlap + v7x megacore sharding).
    b128 = max(128, ((batch + 127) // 128) * 128)
    if b128 <= 128:
        tb = 128
    else:
        half = max(128, (b128 // 2) // 128 * 128)
        tb = max(128, min(block_cols, half))
    b_pad = ((batch + tb - 1) // tb) * tb
    grid = (b_pad // tb,)

    # Batch padding handled here (zeros); padded columns are independent and
    # get sliced off below, so no Pallas-level partial blocks are needed.
    xT = jnp.pad(jnp.transpose(x), ((0, 0), (0, b_pad - batch)))   # (in1, b_pad)

    out_bytes = jnp.dtype(out_dtype).itemsize
    cost = pl.CostEstimate(
        flops=2 * batch * (in1 * h1 + h1 * h2),
        transcendentals=0,
        bytes_accessed=int(xT.size * 4
                           + (w1T.size + w2T.size + h1 + h2) * 4
                           + b_pad * h2 * out_bytes),
    )

    def resident(arr):
        return pl.BlockSpec(arr.shape, lambda i: (0, 0))

    outT = pl.pallas_call(
        _mlp_kernel,
        out_shape=jax.ShapeDtypeStruct((h2, b_pad), out_dtype),
        grid=grid,
        in_specs=[
            pl.BlockSpec((in1, tb), lambda i: (0, i)),   # new lane tile / step
            resident(w1T),                                # VMEM-resident params
            resident(b1c),
            resident(w2T),
            resident(b2c),
        ],
        out_specs=pl.BlockSpec((h2, tb), lambda i: (0, i)),
        compiler_params=pltpu.CompilerParams(
            dimension_semantics=("parallel",)),
        cost_estimate=cost,
    )(xT, w1T, b1c, w2T, b2c)

    # Caller-facing (B, h2): drop lane padding, transpose back.
    return jnp.transpose(outT[:, :batch])


def init_params(key, obs_dim, act_dim, units):
    """Deterministic init mimicking torch.nn.Linear default U(-1/sqrt(fan_in), ...)."""
    h1, h2 = units
    in1 = obs_dim + act_dim
    k = jax.random.split(key, 4)
    bnd1 = 1.0 / jnp.sqrt(in1)
    bnd2 = 1.0 / jnp.sqrt(h1)
    w1 = jax.random.uniform(k[0], (in1, h1), jnp.float32, -bnd1, bnd1)
    b1 = jax.random.uniform(k[1], (1, h1), jnp.float32, -bnd1, bnd1)
    w2 = jax.random.uniform(k[2], (h1, h2), jnp.float32, -bnd2, bnd2)
    b2 = jax.random.uniform(k[3], (1, h2), jnp.float32, -bnd2, bnd2)
    return (w1, b1, w2, b2)


def reference_forward(obs, act, params):
    """Pure-JAX f32 reference matching the PyTorch StateActionEncoder forward."""
    w1, b1, w2, b2 = params
    x = jnp.concatenate([obs, act], axis=-1)
    x = jnp.maximum(x @ w1 + b1, 0.0)
    x = jnp.maximum(x @ w2 + b2, 0.0)
    return x


# TODO(synk): initialize_parameters (torch.nn.init dispatch by name) is a
# parameter-initialization utility, not part of the forward pass; not ported.

if __name__ == "__main__":
    obs_dim, act_dim = 11, 3
    units = [32, 32]     # spec.units; spec.activation="ReLU"; delay_action=False

    key = jax.random.PRNGKey(0)
    k_obs, k_act, k_par = jax.random.split(key, 3)
    params = init_params(k_par, obs_dim, act_dim, units)

    # Case 1: tiny batch (single 128-lane tile), default bf16 output stream.
    batch = 2
    obs = jax.random.normal(k_obs, (batch, obs_dim), jnp.float32)
    act = jax.random.normal(k_act, (batch, act_dim), jnp.float32)
    out = jax.block_until_ready(state_action_mlp(obs, act, params))
    ref = reference_forward(obs, act, params)
    assert out.shape == (batch, units[-1])
    assert out.dtype == jnp.bfloat16
    assert jnp.allclose(out.astype(jnp.float32), ref, atol=2e-2, rtol=2e-2), \
        "mismatch (batch=2, bf16 out)"

    # Case 2: multi-step grid (3 tiles of 128 lanes, batch padded in the
    # wrapper), caller opts into f32 output.
    batch2 = 300
    obs2 = jax.random.normal(jax.random.PRNGKey(1), (batch2, obs_dim), jnp.float32)
    act2 = jax.random.normal(jax.random.PRNGKey(2), (batch2, act_dim), jnp.float32)
    out2 = jax.block_until_ready(
        state_action_mlp(obs2, act2, params, block_cols=128,
                         out_dtype=jnp.float32))
    ref2 = reference_forward(obs2, act2, params)
    assert out2.shape == (batch2, units[-1])
    assert out2.dtype == jnp.float32
    assert jnp.allclose(out2, ref2, atol=2e-2, rtol=2e-2), \
        "mismatch (batch=300, f32 out)"

    print("KERNEL_OK")
</pallas_src>

<mosaic_0001>
module attributes {stable_mosaic.version = 11 : i64} {
  func.func @_mlp_kernel(%arg0: i32, %arg1: memref<14x128xf32, #tpu.memory_space<vmem>>, %arg2: memref<32x14xf32, #tpu.memory_space<vmem>>, %arg3: memref<32x1xf32, #tpu.memory_space<vmem>>, %arg4: memref<32x32xf32, #tpu.memory_space<vmem>>, %arg5: memref<32x1xf32, #tpu.memory_space<vmem>>, %arg6: memref<32x128xbf16, #tpu.memory_space<vmem>>) attributes {dimension_semantics = [#tpu.dimension_semantics<parallel>], iteration_bounds = array<i64: 1>, scalar_prefetch = 0 : i64, scratch_operands = 0 : i64, tpu.core_type = #tpu.core_type<tc>, window_params = [{transform_indices = @transform_0, window_bounds = array<i64: 14, 128>}, {pipeline_mode = #tpu.pipeline_mode<synchronous>, transform_indices = @transform_1, window_bounds = array<i64: 32, 14>}, {pipeline_mode = #tpu.pipeline_mode<synchronous>, transform_indices = @transform_2, window_bounds = array<i64: 32, 1>}, {pipeline_mode = #tpu.pipeline_mode<synchronous>, transform_indices = @transform_3, window_bounds = array<i64: 32, 32>}, {pipeline_mode = #tpu.pipeline_mode<synchronous>, transform_indices = @transform_4, window_bounds = array<i64: 32, 1>}, {transform_indices = @transform_5, window_bounds = array<i64: 32, 128>}]} {
    %c0 = arith.constant 0 : index
    %c0_0 = arith.constant 0 : index
    %0 = vector.load %arg2[%c0, %c0_0] : memref<32x14xf32, #tpu.memory_space<vmem>>, vector<32x14xf32>
    %c0_1 = arith.constant 0 : index
    %c0_2 = arith.constant 0 : index
    %1 = vector.load %arg1[%c0_1, %c0_2] : memref<14x128xf32, #tpu.memory_space<vmem>>, vector<14x128xf32>
    %cst = arith.constant dense<0.000000e+00> : vector<32x128xf32>
    %2 = tpu.matmul %0, %1, %cst {dimension_numbers = #tpu.dot_dimension_numbers<[1], [0], [0], [1], [0, 0, 1, 1], [], []>} : vector<32x14xf32>, vector<14x128xf32>, vector<32x128xf32> -> vector<32x128xf32>
    %c0_3 = arith.constant 0 : index
    %c0_4 = arith.constant 0 : index
    %3 = vector.load %arg3[%c0_3, %c0_4] : memref<32x1xf32, #tpu.memory_space<vmem>>, vector<32x1xf32>
    %4 = vector.broadcast %3 : vector<32x1xf32> to vector<32x128xf32>
    %5 = arith.addf %2, %4 : vector<32x128xf32>
    %cst_5 = arith.constant 0.000000e+00 : f32
    %6 = vector.broadcast %cst_5 : f32 to vector<32x128xf32>
    %7 = arith.maximumf %5, %6 : vector<32x128xf32>
    %c0_6 = arith.constant 0 : index
    %c0_7 = arith.constant 0 : index
    %8 = vector.load %arg4[%c0_6, %c0_7] : memref<32x32xf32, #tpu.memory_space<vmem>>, vector<32x32xf32>
    %cst_8 = arith.constant dense<0.000000e+00> : vector<32x128xf32>
    %9 = tpu.matmul %8, %7, %cst_8 {dimension_numbers = #tpu.dot_dimension_numbers<[1], [0], [0], [1], [0, 0, 1, 1], [], []>} : vector<32x32xf32>, vector<32x128xf32>, vector<32x128xf32> -> vector<32x128xf32>
    %c0_9 = arith.constant 0 : index
    %c0_10 = arith.constant 0 : index
    %10 = vector.load %arg5[%c0_9, %c0_10] : memref<32x1xf32, #tpu.memory_space<vmem>>, vector<32x1xf32>
    %11 = vector.broadcast %10 : vector<32x1xf32> to vector<32x128xf32>
    %12 = arith.addf %9, %11 : vector<32x128xf32>
    %cst_11 = arith.constant 0.000000e+00 : f32
    %13 = vector.broadcast %cst_11 : f32 to vector<32x128xf32>
    %14 = arith.maximumf %12, %13 : vector<32x128xf32>
    %15 = arith.truncf %14 : vector<32x128xf32> to vector<32x128xbf16>
    %c0_12 = arith.constant 0 : index
    %c0_13 = arith.constant 0 : index
    %16 = vector.load %arg6[%c0_12, %c0_13] : memref<32x128xbf16, #tpu.memory_space<vmem>>, vector<32x128xbf16>
    tpu.vector_store %arg6[%c0_12, %c0_13], %15 {strides = array<i32>} : memref<32x128xbf16, #tpu.memory_space<vmem>>, vector<32x128xbf16>,
    return
  }
  func.func @transform_0(%arg0: i32) -> (i32, i32) {
    %c0_i32 = arith.constant 0 : i32
    %c0_i32_0 = arith.constant 0 : i32
    return %c0_i32, %arg0 : i32, i32
  }
  func.func @transform_1(%arg0: i32) -> (i32, i32) {
    %c0_i32 = arith.constant 0 : i32
    %c0_i32_0 = arith.constant 0 : i32
    %c0_i32_1 = arith.constant 0 : i32
    return %c0_i32, %c0_i32_0 : i32, i32
  }
  func.func @transform_2(%arg0: i32) -> (i32, i32) {
    %c0_i32 = arith.constant 0 : i32
    %c0_i32_0 = arith.constant 0 : i32
    %c0_i32_1 = arith.constant 0 : i32
    return %c0_i32, %c0_i32_0 : i32, i32
  }
  func.func @transform_3(%arg0: i32) -> (i32, i32) {
    %c0_i32 = arith.constant 0 : i32
    %c0_i32_0 = arith.constant 0 : i32
    %c0_i32_1 = arith.constant 0 : i32
    return %c0_i32, %c0_i32_0 : i32, i32
  }
  func.func @transform_4(%arg0: i32) -> (i32, i32) {
    %c0_i32 = arith.constant 0 : i32
    %c0_i32_0 = arith.constant 0 : i32
    %c0_i32_1 = arith.constant 0 : i32
    return %c0_i32, %c0_i32_0 : i32, i32
  }
  func.func @transform_5(%arg0: i32) -> (i32, i32) {
    %c0_i32 = arith.constant 0 : i32
    %c0_i32_0 = arith.constant 0 : i32
    return %c0_i32, %arg0 : i32, i32
  }
}

</mosaic_0001>

<llo_original>
// kernel: tpu_custom_call.1
$region0: #{tpu_custom_call.1}
  #allocation0 [shape = 'u32[]', space=smem, size = 0x4, offset = 0x4, fixed_abs, tag = 'smem constant byte address 0x4 - core index']
  #allocation1 [shape = 'u32[144,128]{1,0:T(1,128)}', space=vmem, size = 0x12000, scoped, tag = 'internal scratch']
  %s0 = inlined_call_operand.vmem [shape: f32[14,128], index: 0, kind: input, shape index: {}]
  %s1 = inlined_call_operand.vmem [shape: f32[32,14], index: 1, kind: input, shape index: {}]
  %s2 = inlined_call_operand.vmem [shape: f32[32,1], index: 2, kind: input, shape index: {}]
  %s3 = inlined_call_operand.vmem [shape: f32[32,32], index: 3, kind: input, shape index: {}]
  %s4 = inlined_call_operand.vmem [shape: f32[32,1], index: 4, kind: input, shape index: {}]
  %s5 = inlined_call_operand.hbm [shape: bf16[32,128], index: 5, kind: output, shape index: {}]
  %s6 = sld [smem:[#allocation0]]
  $region30: #{tpu_custom_call.1} parent=0
    _
  %s8 = ssub.s32 1, %s6
  %s9 = scalar_select 0, %s8, %s6
  $region1: #{tpu_custom_call.1} parent=0
    #allocation2 [shape = 'u8[8192]{0}', space=vmem, size = 0x2000, scoped, tag = 'output window, operand 0, single buffered']
    #allocation3 [shape = 's32[1]{0}', space=sflag, size = 0x4, scoped, tag = 'scoped memory for tpu_custom_call.1']
    %10 = vsyncpa [#allocation3], 0
    // Predicated region
    $region2: #{tpu_custom_call.1} parent=1 // pred_check
      _
    $region3: #{tpu_custom_call.1} parent=1 // pred_check_branch
      %12 = sbr.rel (0) target = $region5
    $region4: #{tpu_custom_call.1} parent=1 // pred_region
      _
    $region5: #{tpu_custom_call.1} parent=1 // pred_fallthru
      _
    // Predicated region
    $region6: #{tpu_custom_call.1} parent=1 // pred_check
      _
    $region7: #{tpu_custom_call.1} parent=1 // pred_check_branch
      %14 = sbr.rel (0) target = $region9
    $region8: #{tpu_custom_call.1} parent=1 // pred_region
      _
    $region9: #{tpu_custom_call.1} parent=1 // pred_fallthru
      _
    // Predicated region
    $region10: #{tpu_custom_call.1} parent=1 // pred_check
      _
    $region11: #{tpu_custom_call.1} parent=1 // pred_check_branch
      %16 = sbr.rel (0) target = $region13
    $region12: #{tpu_custom_call.1} parent=1 // pred_region
      _
    $region13: #{tpu_custom_call.1} parent=1 // pred_fallthru
      _
    // Predicated region
    $region14: #{tpu_custom_call.1} parent=1 // pred_check
      _
    $region15: #{tpu_custom_call.1} parent=1 // pred_check_branch
      %18 = sbr.rel (0) target = $region17
    $region16: #{tpu_custom_call.1} parent=1 // pred_region
      _
    $region17: #{tpu_custom_call.1} parent=1 // pred_fallthru
      _
    // Predicated region
    $region18: #{tpu_custom_call.1} parent=1 // pred_check
      _
    $region19: #{tpu_custom_call.1} parent=1 // pred_check_branch
      %20 = sbr.rel (0) target = $region21
    $region20: #{tpu_custom_call.1} parent=1 // pred_region
      _
    $region21: #{tpu_custom_call.1} parent=1 // pred_fallthru
      _
    %v21 = vld [vmem:[%s1] sm:$0xff]
    %v22 = vld [vmem:[%s1 + $0x8] sm:$0xff]
    %v23 = vld [vmem:[%s1 + $0x10] sm:$0xff]
    %v24 = vld [vmem:[%s1 + $0x18] sm:$0xff]
    %v25 = vld [vmem:[%s0] sm:$0xff]
    %v26 = vld [vmem:[%s0 + $0x8] sm:$0x3f]
    %v27 = vld [vmem:[%s2] sm:$0xff]
    %v28 = vld [vmem:[%s2 + $0x8] sm:$0xff]
    %v29 = vld [vmem:[%s2 + $0x10] sm:$0xff]
    %v30 = vld [vmem:[%s2 + $0x18] sm:$0xff]
    %32 = vset.pattern.permute.xlu0 0
    %33 = vperm.xlu0 %32, %v27
    %v34 = vpop.permute.xlu0 %33
    %37 = vset.pattern.permute.xlu0 0
    %38 = vperm.xlu0 %37, %v28
    %v39 = vpop.permute.xlu0 %38
    %42 = vset.pattern.permute.xlu0 0
    %43 = vperm.xlu0 %42, %v29
    %v44 = vpop.permute.xlu0 %43
    %47 = vset.pattern.permute.xlu0 0
    %48 = vperm.xlu0 %47, %v30
    %v49 = vpop.permute.xlu0 %48
    %vm51 = vcmask 113664
    %v53 = vsel %vm51, %v21, 0
    %v56 = vsel %vm51, %v22, 0
    %v59 = vsel %vm51, %v23, 0
    %v62 = vsel %vm51, %v24, 0
    %vm64 = vcmask 1045504
    %v66 = vsel %vm64, %v26, 0
    %68 = vmatprep.subr.mxu0 0.0
    %69 = vmatpush1.msra.mxu0 %v25
    %70 = vmatprep.subr.mxu0 0.0
    %71 = vmatpush1.msra.mxu0 %v66
    %72 = vmatprep.subr.mxu0 0.0
    %73 = vmatpush1.msra.mxu0 0.0
    %74 = vmatprep.subr.mxu0 0.0
    %75 = vmatpush1.msra.mxu0 0.0
    %76 = vmatprep.subr.mxu0 0.0
    %77 = vmatpush1.msra.mxu0 0.0
    %78 = vmatprep.subr.mxu0 0.0
    %79 = vmatpush1.msra.mxu0 0.0
    %80 = vmatprep.subr.mxu0 0.0
    %81 = vmatpush1.msra.mxu0 0.0
    %82 = vmatprep.subr.mxu0 0.0
    %83 = vmatpush1.msra.mxu0 0.0
    %84 = vmatprep.subr.mxu0 0.0
    %85 = vmatpush1.msra.mxu0 0.0
    %86 = vmatprep.subr.mxu0 0.0
    %87 = vmatpush1.msra.mxu0 0.0
    %88 = vmatprep.subr.mxu0 0.0
    %89 = vmatpush1.msra.mxu0 0.0
    %90 = vmatprep.subr.mxu0 0.0
    %91 = vmatpush1.msra.mxu0 0.0
    %92 = vmatprep.subr.mxu0 0.0
    %93 = vmatpush1.msra.mxu0 0.0
    %94 = vmatprep.subr.mxu0 0.0
    %95 = vmatpush1.msra.mxu0 0.0
    %96 = vmatprep.subr.mxu0 0.0
    %97 = vmatpush1.msra.mxu0 0.0
    %98 = vmatprep.subr.mxu0 0.0
    %99 = vmatpush1.msra.mxu0 0.0
    %100 = vmatprep.subr.mxu0 0.0
    %101 = vmatpush1.msra.mxu0 0.0
    %102 = vmatprep.subr.mxu0 0.0
    %103 = vmatpush1.msra.mxu0 0.0
    %104 = vmatprep.subr.mxu0 0.0
    %105 = vmatpush1.msra.mxu0 0.0
    %106 = vmatprep.subr.mxu0 0.0
    %107 = vmatpush1.msra.mxu0 0.0
    %108 = vmatprep.subr.mxu0 0.0
    %109 = vmatpush1.msra.mxu0 0.0
    %110 = vmatprep.subr.mxu0 0.0
    %111 = vmatpush1.msra.mxu0 0.0
    %112 = vmatprep.subr.mxu0 0.0
    %113 = vmatpush1.msra.mxu0 0.0
    %114 = vmatprep.subr.mxu0 0.0
    %115 = vmatpush1.msra.mxu0 0.0
    %116 = vmatprep.subr.mxu0 0.0
    %117 = vmatpush1.msra.mxu0 0.0
    %118 = vmatprep.subr.mxu0 0.0
    %119 = vmatpush1.msra.mxu0 0.0
    %120 = vmatprep.subr.mxu0 0.0
    %121 = vmatpush1.msra.mxu0 0.0
    %122 = vmatprep.subr.mxu0 0.0
    %123 = vmatpush1.msra.mxu0 0.0
    %124 = vmatprep.subr.mxu0 0.0
    %125 = vmatpush1.msra.mxu0 0.0
    %126 = vmatprep.subr.mxu0 0.0
    %127 = vmatpush1.msra.mxu0 0.0
    %128 = vmatprep.subr.mxu0 0.0
    %129 = vmatpush1.msra.mxu0 0.0
    %130 = vmatprep.subr.mxu0 0.0
    %131 = vmatpush1.msra.mxu0 0.0
    %132 = vmatprep.mubr.f32.mxu0 0.0
    %133 = vmatmul.mubr.f32.gmra.mrb[0].mxu0 %v53
    %v134 = vpop.f32.mrb[0].mxu0
    %v135 = vadd.f32 %v34, %v134
    %v136 = vpop.f32.mrb[0].mxu0
    %137 = vmatprep.mubr.f32.mxu0 0.0
    %138 = vmatmul.mubr.f32.gmra.mrb[0].mxu0 %v56
    %v139 = vpop.f32.mrb[0].mxu0
    %v140 = vadd.f32 %v39, %v139
    %v141 = vpop.f32.mrb[0].mxu0
    %142 = vmatprep.mubr.f32.mxu0 0.0
    %143 = vmatmul.mubr.f32.gmra.mrb[0].mxu0 %v59
    %v144 = vpop.f32.mrb[0].mxu0
    %v145 = vadd.f32 %v44, %v144
    %v146 = vpop.f32.mrb[0].mxu0
    %147 = vmatprep.mubr.f32.mxu0 0.0
    %148 = vmatmul.mubr.f32.gmra.mrb[0].mxu0 %v62
    %v149 = vpop.f32.mrb[0].mxu0
    %v150 = vadd.f32 %v49, %v149
    %v151 = vpop.f32.mrb[0].mxu0
    %152 = vdwg.mxu0
    %v153 = vmax.f32 %v135, 0.0
    %v154 = vmax.f32 %v140, 0.0
    %v155 = vmax.f32 %v145, 0.0
    %v156 = vmax.f32 %v150, 0.0
    %v157 = vld [vmem:[%s3] sm:$0xff]
    %v158 = vld [vmem:[%s3 + $0x8] sm:$0xff]
    %v159 = vld [vmem:[%s3 + $0x10] sm:$0xff]
    %v160 = vld [vmem:[%s3 + $0x18] sm:$0xff]
    %v161 = vld [vmem:[%s4] sm:$0xff]
    %v162 = vld [vmem:[%s4 + $0x8] sm:$0xff]
    %v163 = vld [vmem:[%s4 + $0x10] sm:$0xff]
    %v164 = vld [vmem:[%s4 + $0x18] sm:$0xff]
    %166 = vset.pattern.permute.xlu0 0
    %167 = vperm.xlu0 %166, %v161
    %v168 = vpop.permute.xlu0 %167
    %171 = vset.pattern.permute.xlu0 0
    %172 = vperm.xlu0 %171, %v162
    %v173 = vpop.permute.xlu0 %172
    %176 = vset.pattern.permute.xlu0 0
    %177 = vperm.xlu0 %176, %v163
    %v178 = vpop.permute.xlu0 %177
    %181 = vset.pattern.permute.xlu0 0
    %182 = vperm.xlu0 %181, %v164
    %v183 = vpop.permute.xlu0 %182
    %vm185 = vcmask 261120
    %v187 = vsel %vm185, %v157, 0
    %v190 = vsel %vm185, %v158, 0
    %v193 = vsel %vm185, %v159, 0
    %v196 = vsel %vm185, %v160, 0
    %198 = vmatprep.subr.mxu0 0.0
    %199 = vmatpush1.msra.mxu0 %v153
    %200 = vmatprep.subr.mxu0 0.0
    %201 = vmatpush1.msra.mxu0 %v154
    %202 = vmatprep.subr.mxu0 0.0
    %203 = vmatpush1.msra.mxu0 %v155
    %204 = vmatprep.subr.mxu0 0.0
    %205 = vmatpush1.msra.mxu0 %v156
    %206 = vmatprep.subr.mxu0 0.0
    %207 = vmatpush1.msra.mxu0 0.0
    %208 = vmatprep.subr.mxu0 0.0
    %209 = vmatpush1.msra.mxu0 0.0
    %210 = vmatprep.subr.mxu0 0.0
    %211 = vmatpush1.msra.mxu0 0.0
    %212 = vmatprep.subr.mxu0 0.0
    %213 = vmatpush1.msra.mxu0 0.0
    %214 = vmatprep.subr.mxu0 0.0
    %215 = vmatpush1.msra.mxu0 0.0
    %216 = vmatprep.subr.mxu0 0.0
    %217 = vmatpush1.msra.mxu0 0.0
    %218 = vmatprep.subr.mxu0 0.0
    %219 = vmatpush1.msra.mxu0 0.0
    %220 = vmatprep.subr.mxu0 0.0
    %221 = vmatpush1.msra.mxu0 0.0
    %222 = vmatprep.subr.mxu0 0.0
    %223 = vmatpush1.msra.mxu0 0.0
    %224 = vmatprep.subr.mxu0 0.0
    %225 = vmatpush1.msra.mxu0 0.0
    %226 = vmatprep.subr.mxu0 0.0
    %227 = vmatpush1.msra.mxu0 0.0
    %228 = vmatprep.subr.mxu0 0.0
    %229 = vmatpush1.msra.mxu0 0.0
    %230 = vmatprep.subr.mxu0 0.0
    %231 = vmatpush1.msra.mxu0 0.0
    %232 = vmatprep.subr.mxu0 0.0
    %233 = vmatpush1.msra.mxu0 0.0
    %234 = vmatprep.subr.mxu0 0.0
    %235 = vmatpush1.msra.mxu0 0.0
    %236 = vmatprep.subr.mxu0 0.0
    %237 = vmatpush1.msra.mxu0 0.0
    %238 = vmatprep.subr.mxu0 0.0
    %239 = vmatpush1.msra.mxu0 0.0
    %240 = vmatprep.subr.mxu0 0.0
    %241 = vmatpush1.msra.mxu0 0.0
    %242 = vmatprep.subr.mxu0 0.0
    %243 = vmatpush1.msra.mxu0 0.0
    %244 = vmatprep.subr.mxu0 0.0
    %245 = vmatpush1.msra.mxu0 0.0
    %246 = vmatprep.subr.mxu0 0.0
    %247 = vmatpush1.msra.mxu0 0.0
    %248 = vmatprep.subr.mxu0 0.0
    %249 = vmatpush1.msra.mxu0 0.0
    %250 = vmatprep.subr.mxu0 0.0
    %251 = vmatpush1.msra.mxu0 0.0
    %252 = vmatprep.subr.mxu0 0.0
    %253 = vmatpush1.msra.mxu0 0.0
    %254 = vmatprep.subr.mxu0 0.0
    %255 = vmatpush1.msra.mxu0 0.0
    %256 = vmatprep.subr.mxu0 0.0
    %257 = vmatpush1.msra.mxu0 0.0
    %258 = vmatprep.subr.mxu0 0.0
    %259 = vmatpush1.msra.mxu0 0.0
    %260 = vmatprep.subr.mxu0 0.0
    %261 = vmatpush1.msra.mxu0 0.0
    %262 = vmatprep.mubr.f32.mxu0 0.0
    %263 = vmatmul.mubr.f32.gmra.mrb[0].mxu0 %v187
    %v264 = vpop.f32.mrb[0].mxu0
    %v265 = vadd.f32 %v168, %v264
    %v266 = vpop.f32.mrb[0].mxu0
    %267 = vmatprep.mubr.f32.mxu0 0.0
    %268 = vmatmul.mubr.f32.gmra.mrb[0].mxu0 %v190
    %v269 = vpop.f32.mrb[0].mxu0
    %v270 = vadd.f32 %v173, %v269
    %v271 = vpop.f32.mrb[0].mxu0
    %272 = vmatprep.mubr.f32.mxu0 0.0
    %273 = vmatmul.mubr.f32.gmra.mrb[0].mxu0 %v193
    %v274 = vpop.f32.mrb[0].mxu0
    %v275 = vadd.f32 %v178, %v274
    %v276 = vpop.f32.mrb[0].mxu0
    %277 = vmatprep.mubr.f32.mxu0 0.0
    %278 = vmatmul.mubr.f32.gmra.mrb[0].mxu0 %v196
    %v279 = vpop.f32.mrb[0].mxu0
    %v280 = vadd.f32 %v183, %v279
    %v281 = vpop.f32.mrb[0].mxu0
    %282 = vdwg.mxu0
    %v283 = vmax.f32 %v265, 0.0
    %v284 = vmax.f32 %v270, 0.0
    %v285 = vmax.f32 %v275, 0.0
    %v286 = vmax.f32 %v280, 0.0
    %v287 = vpack.c.bf16 %v284, %v283
    %v288 = vpack.c.bf16 %v286, %v285
    %v291 = vunpack.c.l.b16 %v287
    %v292 = vunpack.c.h.b16 %v287
    %v293 = vunpack.c.l.b16 %v288
    %v294 = vunpack.c.h.b16 %v288
    %v295 = vpack.c.b16 %v291, %v291
    %v296 = vpack.c.b16 %v292, %v292
    %v297 = vpack.c.b16 %v293, %v293
    %v298 = vpack.c.b16 %v294, %v294
    %303 = vst [vmem:[#allocation2] sm:$0xf] %v295
    %304 = vst [vmem:[#allocation2 + $0x4] sm:$0xf] %v296
    %305 = vst [vmem:[#allocation2 + $0x8] sm:$0xf] %v297
    %306 = vst [vmem:[#allocation2 + $0xc] sm:$0xf] %v298
    // Predicated region
    $region22: #{tpu_custom_call.1} parent=1 // pred_check
      _
    $region23: #{tpu_custom_call.1} parent=1 // pred_check_branch
      %308 = sbr.rel (0) target = $region25
    $region24: #{tpu_custom_call.1} parent=1 // pred_region
      %s310 = ssub.s32 256, 256
      %311 = vsyncadd [#allocation3], %s310
      %s312 = sshll.u32 [#allocation2], 4
      %s313 = int_to_ptr.vmem [resolvable:$true] %s312
      %318 = dma.vmem_to_hbm [thread:$0]  %s313, 256, %s5, [#allocation3], 64, 64, 4
    $region25: #{tpu_custom_call.1} parent=1 // pred_fallthru
      _
    // Predicated region
    $region26: #{tpu_custom_call.1} parent=1 // pred_check
      _
    $region27: #{tpu_custom_call.1} parent=1 // pred_check_branch
      %320 = sbr.rel (0) target = $region29
    $region28: #{tpu_custom_call.1} parent=1 // pred_region
      %321 = dma.done [#allocation3], 256
    $region29: #{tpu_custom_call.1} parent=1 // pred_fallthru
      _
    %322 = vsyncpa [#allocation3], 1

</llo_original>
